<compile_context>
chip_gen: v7x
topology: tpu7x:2x2x1
jax: 0.10.0
libtpu: 0.0.40
codegen_flags: <defaults>
</compile_context>

<pallas_src>
import functools
import math

import jax
import jax.numpy as jnp
import numpy as np
from jax.experimental import pallas as pl
from jax.experimental.pallas import tpu as pltpu


def _round_up(x, m):
    return (x + m - 1) // m * m


def nt_xent_kernel(q_ref, k_ref, out_ref, m_ref, s_ref, *,
                   batch_size, n_valid, n_pad, tile_m, tile_n, k_resident):
    i = pl.program_id(0)            # row-tile index ('parallel')
    j = pl.program_id(1)            # col-tile index (reduction, 'arbitrary', last)
    n_col_tiles = pl.num_programs(1)
    has_pad = n_valid < n_pad       # Python bool (trace-time)

    @pl.when(j == 0)
    def _init():
        # Online-logsumexp state seeded with the extra 0-logit of the CE formulation:
        # m = max(processed) = 0, s = sum exp(x - m) = exp(0 - 0) = 1.
        m_ref[...] = jnp.zeros_like(m_ref)
        s_ref[...] = jnp.ones_like(s_ref)

    # Inputs are already L2-normalized, temperature-scaled (key side) and cast in the
    # wrapper, so the tile similarity is a single MXU matmul with f32 accumulation.
    if k_resident:
        # Whole key matrix lives in VMEM (index_map is constant), slice the current tile.
        k = k_ref[pl.ds(pl.multiple_of(j * tile_n, tile_n), tile_n), :]
    else:
        k = k_ref[...]
    sim = jax.lax.dot_general(q_ref[...], k, (((1,), (1,)), ((), ())),
                              preferred_element_type=jnp.float32)      # (tm, tn) f32

    def lse_update(logits):
        m_prev = m_ref[...]
        m_new = jnp.maximum(m_prev, jnp.max(logits, axis=-1, keepdims=True))
        s_ref[...] = (s_ref[...] * jnp.exp(m_prev - m_new)
                      + jnp.sum(jnp.exp(logits - m_new), axis=-1, keepdims=True))
        m_ref[...] = m_new

    # Scalar predicate: does this tile touch the diagonal, a ±batch_size positive band,
    # or (if padded) a column tile containing padded columns?  Built from program_id and
    # Python constants only — interior tiles skip all mask work.
    row_lo = i * tile_m
    col_lo = j * tile_n

    def band_hits(off):
        lo = row_lo + off
        return (col_lo < lo + tile_m) & (lo < col_lo + tile_n)

    needs_mask = band_hits(0) | band_hits(batch_size) | band_hits(-batch_size)
    if has_pad:
        needs_mask = needs_mask | (j >= n_valid // tile_n)

    @pl.when(needs_mask)
    def _masked_path():
        # (tm,1)/(1,tn) iotas broadcast in the compares — no full-tile iota generation.
        row = row_lo + jax.lax.broadcasted_iota(jnp.int32, (tile_m, 1), 0)
        col = col_lo + jax.lax.broadcasted_iota(jnp.int32, (1, tile_n), 1)
        drop = (col == row) | (col == row + batch_size) | (col == row - batch_size)
        if has_pad:
            drop = drop | (col >= n_valid)
        lse_update(jnp.where(drop, -1e30, sim))

    @pl.when(jnp.logical_not(needs_mask))
    def _fast_path():
        lse_update(sim)

    @pl.when(j == n_col_tiles - 1)
    def _finalize():
        # row_loss = logsumexp([0, negatives...]) per row of this row tile.
        row_loss = m_ref[...] + jnp.log(s_ref[...])                    # (tm, 1)
        if has_pad:
            row = row_lo + jax.lax.broadcasted_iota(jnp.int32, (tile_m, 1), 0)
            row_loss = jnp.where(row < n_valid, row_loss, 0.0)
        # Lane-dense (1,1,128) partial: lane 0 holds this row tile's CE sum.
        lane = jax.lax.broadcasted_iota(jnp.int32, (1, 1, 128), 2)
        out_ref[...] = jnp.where(lane == 0, jnp.sum(row_loss), 0.0)


def nt_xent(z_i, z_j, temperature, *, tile_m=None, tile_n=None,
            mm_dtype=jnp.bfloat16, k_resident=None):
    """Returns (loss, pos_mean, neg_mean) matching NT_Xent.forward."""
    B, D = z_i.shape
    assert z_j.shape == (B, D)
    N = 2 * B
    inv_t = 1.0 / temperature

    z = jnp.concatenate([z_i, z_j], axis=0).astype(jnp.float32)        # (N, D)

    # ---- O(N*D) prework in f32, hoisted out of the kernel ----------------------------
    norm = jnp.sqrt(jnp.sum(z * z, axis=-1, keepdims=True))
    z_hat = z / jnp.maximum(norm, 1e-8)                                # L2-normalized rows
    # Exact f32 reductions (no N^2 work needed for these):
    pos_sum = 2.0 * jnp.sum(z_hat[:B] * z_hat[B:]) * inv_t             # positives
    diag_sum = N * inv_t                                               # cos(z, z) == 1
    tot_sum = jnp.sum(jnp.square(jnp.sum(z_hat, axis=0))) * inv_t      # sum of full sim

    # ---- tile plan --------------------------------------------------------------------
    if tile_m is None or tile_n is None:
        if N >= 2048:
            tm, tn = 512, 1024     # big tiles: few grid steps, still >=2 row tiles (v7x)
        elif N >= 512:
            tm, tn = 256, 512
        else:
            tm = tn = _round_up(N, 8)
    else:
        tm, tn = tile_m, tile_n

    n_pad = _round_up(N, math.lcm(tm, tn))     # zero-row padding, handled in-kernel
    d_pad = _round_up(D, 128)                  # lane-aligned; exactly 128 when D <= 128

    # 1/temperature folded into the key side only; both operands pre-cast to mm_dtype so
    # the kernel body starts directly at the MXU matmul (bf16 halves HBM DMA bytes).
    q_pad = jnp.pad(z_hat, ((0, n_pad - N), (0, d_pad - D))).astype(mm_dtype)
    k_pad = jnp.pad(z_hat * inv_t, ((0, n_pad - N), (0, d_pad - D))).astype(mm_dtype)

    if k_resident is None:
        # Keep the whole key matrix VMEM-resident when it is small (single HBM pass).
        k_resident = n_pad * d_pad * jnp.dtype(mm_dtype).itemsize <= 4 * 1024 * 1024

    grid = (n_pad // tm, n_pad // tn)
    kernel = functools.partial(
        nt_xent_kernel,
        batch_size=B, n_valid=N, n_pad=n_pad,
        tile_m=tm, tile_n=tn, k_resident=k_resident)

    if k_resident:
        k_spec = pl.BlockSpec((n_pad, d_pad), lambda i, j: (0, 0))     # fetched once
    else:
        k_spec = pl.BlockSpec((tn, d_pad), lambda i, j: (j, 0))

    parts = pl.pallas_call(
        kernel,
        out_shape=jax.ShapeDtypeStruct((grid[0], 1, 128), jnp.float32),
        grid=grid,
        in_specs=[pl.BlockSpec((tm, d_pad), lambda i, j: (i, 0)),      # query rows
                  k_spec],                                             # key rows
        out_specs=pl.BlockSpec((1, 1, 128), lambda i, j: (i, 0, 0)),
        scratch_shapes=[pltpu.VMEM((tm, 1), jnp.float32),              # running max m
                        pltpu.VMEM((tm, 1), jnp.float32)],             # running sum s
        compiler_params=pltpu.CompilerParams(
            dimension_semantics=("parallel", "arbitrary"),
            # Working set (double-buffered bf16 tiles + f32 tile temps) stays well below
            # 32 MiB, which is also safe on v7x's 64 MiB VMEM; raise on v5e/v6e if needed.
            vmem_limit_bytes=32 * 1024 * 1024),
    )(q_pad, k_pad)

    ce_sum = jnp.sum(parts[:, 0, 0])           # sum_r logsumexp([0, negatives_r])

    loss = (ce_sum - pos_sum) / N
    pos_mean = pos_sum / N * temperature
    neg_sum = tot_sum - pos_sum - diag_sum
    # NOTE: for batch_size == 1, N - 2 == 0 and PyTorch's mean over an empty negatives
    # tensor is NaN as well; we intentionally mirror that behavior.
    neg_mean = neg_sum / (N * (N - 2)) * temperature
    return loss, pos_mean, neg_mean


def nt_xent_reference(z_i, z_j, temperature):
    # Pure-JAX reference mirroring the PyTorch module semantics (f32 throughout).
    B = z_i.shape[0]
    N = 2 * B
    z = jnp.concatenate([z_i, z_j], axis=0).astype(jnp.float32)
    norm = jnp.sqrt(jnp.sum(z * z, axis=-1, keepdims=True))
    sim = (z @ z.T) / jnp.maximum(norm * norm.T, 1e-8) / temperature
    pos = jnp.concatenate([jnp.diagonal(sim, B), jnp.diagonal(sim, -B)])       # (N,)
    eye = jnp.eye(N, dtype=bool)
    pmask = jnp.roll(eye, B, axis=1) | jnp.roll(eye, -B, axis=1)
    nmask = ~(eye | pmask)
    negs = sim[nmask].reshape(N, -1)                                           # (N, N-2)
    logits = jnp.concatenate([jnp.zeros((N, 1)), negs], axis=1)
    ce = jnp.sum(jax.nn.logsumexp(logits, axis=1) - logits[:, 0])
    loss = (ce - jnp.sum(pos)) / N
    return loss, jnp.mean(pos) * temperature, jnp.mean(negs) * temperature


if __name__ == "__main__":
    temperature = 0.5
    key = jax.random.PRNGKey(0)
    k1, k2, k3, k4, k5, k6 = jax.random.split(key, 6)

    # Case 1: tiny SimCLR shape (batch=4, hidden=32), exact f32 MXU path, single tile.
    z_i = jax.random.normal(k1, (4, 32), dtype=jnp.float32)
    z_j = jax.random.normal(k2, (4, 32), dtype=jnp.float32)
    out = jax.block_until_ready(nt_xent(z_i, z_j, temperature, mm_dtype=jnp.float32))
    ref = nt_xent_reference(z_i, z_j, temperature)
    for a, b in zip(out, ref):
        np.testing.assert_allclose(np.asarray(a), np.asarray(b), rtol=1e-4, atol=1e-5)

    # Case 2: multi-tile grid with row/col padding (N=20 -> 24, grid=(3,3)), bf16 MXU,
    # VMEM-resident key matrix; exercises the masked path + padded-column bound.
    z_i = jax.random.normal(k3, (10, 48), dtype=jnp.float32)
    z_j = jax.random.normal(k4, (10, 48), dtype=jnp.float32)
    out = jax.block_until_ready(nt_xent(z_i, z_j, temperature, tile_m=8, tile_n=8))
    ref = nt_xent_reference(z_i, z_j, temperature)
    for a, b in zip(out, ref):
        np.testing.assert_allclose(np.asarray(a), np.asarray(b), rtol=2e-2, atol=2e-2)

    # Case 3: batch=64 (N=128), D=64, forced 32x32 tiles with the tiled (non-resident)
    # key path; exercises interior fast-path tiles alongside diagonal/positive-band tiles.
    z_i = jax.random.normal(k5, (64, 64), dtype=jnp.float32)
    z_j = jax.random.normal(k6, (64, 64), dtype=jnp.float32)
    out = jax.block_until_ready(
        nt_xent(z_i, z_j, temperature, tile_m=32, tile_n=32, k_resident=False))
    ref = nt_xent_reference(z_i, z_j, temperature)
    for a, b in zip(out, ref):
        np.testing.assert_allclose(np.asarray(a), np.asarray(b), rtol=2e-2, atol=2e-2)

    print("KERNEL_OK")
</pallas_src>

<mosaic_0001>
module attributes {stable_mosaic.version = 11 : i64} {
  func.func @nt_xent_kernel(%arg0: i32, %arg1: i32, %arg2: memref<8x128xf32, #tpu.memory_space<vmem>>, %arg3: memref<8x128xf32, #tpu.memory_space<vmem>>, %arg4: memref<1x1x128xf32, #tpu.memory_space<vmem>>, %arg5: memref<8x1xf32, #tpu.memory_space<vmem>>, %arg6: memref<8x1xf32, #tpu.memory_space<vmem>>) attributes {dimension_semantics = [#tpu.dimension_semantics<parallel>, #tpu.dimension_semantics<arbitrary>], iteration_bounds = array<i64: 1, 1>, scalar_prefetch = 0 : i64, scratch_operands = 2 : i64, tpu.core_type = #tpu.core_type<tc>, window_params = [{transform_indices = @transform_0, window_bounds = array<i64: 8, 128>}, {pipeline_mode = #tpu.pipeline_mode<synchronous>, transform_indices = @transform_1, window_bounds = array<i64: 8, 128>}, {transform_indices = @transform_2, window_bounds = array<i64: 1, 1, 128>}]} {
    %c0_i32 = arith.constant 0 : i32
    %0 = arith.cmpi eq, %arg1, %c0_i32 : i32
    %1 = arith.extui %0 : i1 to i32
    %c0_i32_0 = arith.constant 0 : i32
    %2 = arith.cmpi ne, %1, %c0_i32_0 : i32
    scf.if %2 {
      %cst_16 = arith.constant 0.000000e+00 : f32
      %39 = vector.broadcast %cst_16 : f32 to vector<8x1xf32>
      %c0_17 = arith.constant 0 : index
      %c0_18 = arith.constant 0 : index
      %40 = vector.load %arg5[%c0_17, %c0_18] : memref<8x1xf32, #tpu.memory_space<vmem>>, vector<8x1xf32>
      tpu.vector_store %arg5[%c0_17, %c0_18], %39 {strides = array<i32>} : memref<8x1xf32, #tpu.memory_space<vmem>>, vector<8x1xf32>,
      %cst_19 = arith.constant 1.000000e+00 : f32
      %41 = vector.broadcast %cst_19 : f32 to vector<8x1xf32>
      %c0_20 = arith.constant 0 : index
      %c0_21 = arith.constant 0 : index
      %42 = vector.load %arg6[%c0_20, %c0_21] : memref<8x1xf32, #tpu.memory_space<vmem>>, vector<8x1xf32>
      tpu.vector_store %arg6[%c0_20, %c0_21], %41 {strides = array<i32>} : memref<8x1xf32, #tpu.memory_space<vmem>>, vector<8x1xf32>,
    } else {
    }
    %c8_i32 = arith.constant 8 : i32
    %3 = arith.muli %arg1, %c8_i32 : i32
    %4 = tpu.assume_multiple %3, 8 : i32
    %5 = arith.index_cast %4 : i32 to index
    %c0 = arith.constant 0 : index
    %6 = vector.load %arg3[%5, %c0] : memref<8x128xf32, #tpu.memory_space<vmem>>, vector<8x128xf32>
    %c0_1 = arith.constant 0 : index
    %c0_2 = arith.constant 0 : index
    %7 = vector.load %arg2[%c0_1, %c0_2] : memref<8x128xf32, #tpu.memory_space<vmem>>, vector<8x128xf32>
    %cst = arith.constant dense<0.000000e+00> : vector<8x8xf32>
    %8 = tpu.matmul %7, %6, %cst {dimension_numbers = #tpu.dot_dimension_numbers<[1], [1], [0], [0], [0, 0, 1, 0], [], []>} : vector<8x128xf32>, vector<8x128xf32>, vector<8x8xf32> -> vector<8x8xf32>
    %c8_i32_3 = arith.constant 8 : i32
    %9 = arith.muli %arg0, %c8_i32_3 : i32
    %c8_i32_4 = arith.constant 8 : i32
    %10 = arith.muli %arg1, %c8_i32_4 : i32
    %c0_i32_5 = arith.constant 0 : i32
    %11 = arith.addi %9, %c0_i32_5 : i32
    %c8_i32_6 = arith.constant 8 : i32
    %12 = arith.addi %11, %c8_i32_6 : i32
    %13 = arith.cmpi slt, %10, %12 : i32
    %c8_i32_7 = arith.constant 8 : i32
    %14 = arith.addi %10, %c8_i32_7 : i32
    %15 = arith.cmpi slt, %11, %14 : i32
    %16 = arith.andi %13, %15 : i1
    %c4_i32 = arith.constant 4 : i32
    %17 = arith.addi %9, %c4_i32 : i32
    %c8_i32_8 = arith.constant 8 : i32
    %18 = arith.addi %17, %c8_i32_8 : i32
    %19 = arith.cmpi slt, %10, %18 : i32
    %c8_i32_9 = arith.constant 8 : i32
    %20 = arith.addi %10, %c8_i32_9 : i32
    %21 = arith.cmpi slt, %17, %20 : i32
    %22 = arith.andi %19, %21 : i1
    %23 = arith.ori %16, %22 : i1
    %c-4_i32 = arith.constant -4 : i32
    %24 = arith.addi %9, %c-4_i32 : i32
    %c8_i32_10 = arith.constant 8 : i32
    %25 = arith.addi %24, %c8_i32_10 : i32
    %26 = arith.cmpi slt, %10, %25 : i32
    %c8_i32_11 = arith.constant 8 : i32
    %27 = arith.addi %10, %c8_i32_11 : i32
    %28 = arith.cmpi slt, %24, %27 : i32
    %29 = arith.andi %26, %28 : i1
    %30 = arith.ori %23, %29 : i1
    %31 = arith.extui %30 : i1 to i32
    %c0_i32_12 = arith.constant 0 : i32
    %32 = arith.cmpi ne, %31, %c0_i32_12 : i32
    scf.if %32 {
      %39 = tpu.iota {dimensions = array<i32: 0>} : vector<8x1xi32>
      %40 = vector.broadcast %9 : i32 to vector<8x1xi32>
      %41 = arith.addi %40, %39 : vector<8x1xi32>
      %42 = tpu.iota {dimensions = array<i32: 1>} : vector<1x8xi32>
      %43 = vector.broadcast %10 : i32 to vector<1x8xi32>
      %44 = arith.addi %43, %42 : vector<1x8xi32>
      %45 = vector.broadcast %44 : vector<1x8xi32> to vector<8x8xi32>
      %46 = vector.broadcast %41 : vector<8x1xi32> to vector<8x8xi32>
      %47 = arith.cmpi eq, %45, %46 : vector<8x8xi32>
      %c4_i32_16 = arith.constant 4 : i32
      %48 = vector.broadcast %c4_i32_16 : i32 to vector<8x1xi32>
      %49 = arith.addi %41, %48 : vector<8x1xi32>
      %50 = vector.broadcast %44 : vector<1x8xi32> to vector<8x8xi32>
      %51 = vector.broadcast %49 : vector<8x1xi32> to vector<8x8xi32>
      %52 = arith.cmpi eq, %50, %51 : vector<8x8xi32>
      %53 = arith.ori %47, %52 : vector<8x8xi1>
      %c4_i32_17 = arith.constant 4 : i32
      %54 = vector.broadcast %c4_i32_17 : i32 to vector<8x1xi32>
      %55 = arith.subi %41, %54 : vector<8x1xi32>
      %56 = vector.broadcast %44 : vector<1x8xi32> to vector<8x8xi32>
      %57 = vector.broadcast %55 : vector<8x1xi32> to vector<8x8xi32>
      %58 = arith.cmpi eq, %56, %57 : vector<8x8xi32>
      %59 = arith.ori %53, %58 : vector<8x8xi1>
      %cst_18 = arith.constant -1.000000e+30 : f32
      %60 = vector.broadcast %cst_18 : f32 to vector<8x8xf32>
      %61 = arith.select %59, %60, %8 : vector<8x8xi1>, vector<8x8xf32>
      %c0_19 = arith.constant 0 : index
      %c0_20 = arith.constant 0 : index
      %62 = vector.load %arg5[%c0_19, %c0_20] : memref<8x1xf32, #tpu.memory_space<vmem>>, vector<8x1xf32>
      %cst_21 = arith.constant dense<0xFF800000> : vector<8xf32>
      %63 = vector.multi_reduction <maximumf>, %61, %cst_21 [1] : vector<8x8xf32> to vector<8xf32>
      %64 = vector.shape_cast %63 : vector<8xf32> to vector<8x1xf32>
      %65 = arith.maximumf %62, %64 : vector<8x1xf32>
      %c0_22 = arith.constant 0 : index
      %c0_23 = arith.constant 0 : index
      %66 = vector.load %arg6[%c0_22, %c0_23] : memref<8x1xf32, #tpu.memory_space<vmem>>, vector<8x1xf32>
      %67 = arith.subf %62, %65 : vector<8x1xf32>
      %68 = math.exp %67 : vector<8x1xf32>
      %69 = arith.mulf %66, %68 : vector<8x1xf32>
      %70 = vector.broadcast %65 : vector<8x1xf32> to vector<8x8xf32>
      %71 = arith.subf %61, %70 : vector<8x8xf32>
      %72 = math.exp %71 : vector<8x8xf32>
      %cst_24 = arith.constant dense<0.000000e+00> : vector<8xf32>
      %73 = vector.multi_reduction <add>, %72, %cst_24 [1] : vector<8x8xf32> to vector<8xf32>
      %74 = vector.shape_cast %73 : vector<8xf32> to vector<8x1xf32>
      %75 = arith.addf %69, %74 : vector<8x1xf32>
      %c0_25 = arith.constant 0 : index
      %c0_26 = arith.constant 0 : index
      %76 = vector.load %arg6[%c0_25, %c0_26] : memref<8x1xf32, #tpu.memory_space<vmem>>, vector<8x1xf32>
      tpu.vector_store %arg6[%c0_25, %c0_26], %75 {strides = array<i32>} : memref<8x1xf32, #tpu.memory_space<vmem>>, vector<8x1xf32>,
      %c0_27 = arith.constant 0 : index
      %c0_28 = arith.constant 0 : index
      %77 = vector.load %arg5[%c0_27, %c0_28] : memref<8x1xf32, #tpu.memory_space<vmem>>, vector<8x1xf32>
      tpu.vector_store %arg5[%c0_27, %c0_28], %65 {strides = array<i32>} : memref<8x1xf32, #tpu.memory_space<vmem>>, vector<8x1xf32>,
    } else {
    }
    %true = arith.constant true
    %33 = arith.xori %30, %true : i1
    %34 = arith.extui %33 : i1 to i32
    %c0_i32_13 = arith.constant 0 : i32
    %35 = arith.cmpi ne, %34, %c0_i32_13 : i32
    scf.if %35 {
      %c0_16 = arith.constant 0 : index
      %c0_17 = arith.constant 0 : index
      %39 = vector.load %arg5[%c0_16, %c0_17] : memref<8x1xf32, #tpu.memory_space<vmem>>, vector<8x1xf32>
      %cst_18 = arith.constant dense<0xFF800000> : vector<8xf32>
      %40 = vector.multi_reduction <maximumf>, %8, %cst_18 [1] : vector<8x8xf32> to vector<8xf32>
      %41 = vector.shape_cast %40 : vector<8xf32> to vector<8x1xf32>
      %42 = arith.maximumf %39, %41 : vector<8x1xf32>
      %c0_19 = arith.constant 0 : index
      %c0_20 = arith.constant 0 : index
      %43 = vector.load %arg6[%c0_19, %c0_20] : memref<8x1xf32, #tpu.memory_space<vmem>>, vector<8x1xf32>
      %44 = arith.subf %39, %42 : vector<8x1xf32>
      %45 = math.exp %44 : vector<8x1xf32>
      %46 = arith.mulf %43, %45 : vector<8x1xf32>
      %47 = vector.broadcast %42 : vector<8x1xf32> to vector<8x8xf32>
      %48 = arith.subf %8, %47 : vector<8x8xf32>
      %49 = math.exp %48 : vector<8x8xf32>
      %cst_21 = arith.constant dense<0.000000e+00> : vector<8xf32>
      %50 = vector.multi_reduction <add>, %49, %cst_21 [1] : vector<8x8xf32> to vector<8xf32>
      %51 = vector.shape_cast %50 : vector<8xf32> to vector<8x1xf32>
      %52 = arith.addf %46, %51 : vector<8x1xf32>
      %c0_22 = arith.constant 0 : index
      %c0_23 = arith.constant 0 : index
      %53 = vector.load %arg6[%c0_22, %c0_23] : memref<8x1xf32, #tpu.memory_space<vmem>>, vector<8x1xf32>
      tpu.vector_store %arg6[%c0_22, %c0_23], %52 {strides = array<i32>} : memref<8x1xf32, #tpu.memory_space<vmem>>, vector<8x1xf32>,
      %c0_24 = arith.constant 0 : index
      %c0_25 = arith.constant 0 : index
      %54 = vector.load %arg5[%c0_24, %c0_25] : memref<8x1xf32, #tpu.memory_space<vmem>>, vector<8x1xf32>
      tpu.vector_store %arg5[%c0_24, %c0_25], %42 {strides = array<i32>} : memref<8x1xf32, #tpu.memory_space<vmem>>, vector<8x1xf32>,
    } else {
    }
    %c0_i32_14 = arith.constant 0 : i32
    %36 = arith.cmpi eq, %arg1, %c0_i32_14 : i32
    %37 = arith.extui %36 : i1 to i32
    %c0_i32_15 = arith.constant 0 : i32
    %38 = arith.cmpi ne, %37, %c0_i32_15 : i32
    scf.if %38 {
      %c0_16 = arith.constant 0 : index
      %c0_17 = arith.constant 0 : index
      %39 = vector.load %arg5[%c0_16, %c0_17] : memref<8x1xf32, #tpu.memory_space<vmem>>, vector<8x1xf32>
      %c0_18 = arith.constant 0 : index
      %c0_19 = arith.constant 0 : index
      %40 = vector.load %arg6[%c0_18, %c0_19] : memref<8x1xf32, #tpu.memory_space<vmem>>, vector<8x1xf32>
      %41 = math.log %40 : vector<8x1xf32>
      %42 = arith.addf %39, %41 : vector<8x1xf32>
      %43 = tpu.iota {dimensions = array<i32: 2>} : vector<1x1x128xi32>
      %c0_i32_20 = arith.constant 0 : i32
      %44 = vector.broadcast %c0_i32_20 : i32 to vector<1x1x128xi32>
      %45 = arith.cmpi eq, %43, %44 : vector<1x1x128xi32>
      %46 = vector.shape_cast %42 : vector<8x1xf32> to vector<1x8x1xf32>
      %cst_21 = arith.constant dense<0.000000e+00> : vector<1xf32>
      %47 = vector.multi_reduction <add>, %46, %cst_21 [1, 2] : vector<1x8x1xf32> to vector<1xf32>
      %48 = vector.shape_cast %47 : vector<1xf32> to vector<1x1x1xf32>
      %49 = vector.extract %48[0, 0, 0] : f32 from vector<1x1x1xf32>
      %cst_22 = arith.constant 0.000000e+00 : f32
      %50 = vector.broadcast %49 : f32 to vector<1x1x128xf32>
      %51 = vector.broadcast %cst_22 : f32 to vector<1x1x128xf32>
      %52 = arith.select %45, %50, %51 : vector<1x1x128xi1>, vector<1x1x128xf32>
      %c0_23 = arith.constant 0 : index
      %c0_24 = arith.constant 0 : index
      %c0_25 = arith.constant 0 : index
      %53 = vector.load %arg4[%c0_23, %c0_24, %c0_25] : memref<1x1x128xf32, #tpu.memory_space<vmem>>, vector<1x1x128xf32>
      tpu.vector_store %arg4[%c0_23, %c0_24, %c0_25], %52 {strides = array<i32>} : memref<1x1x128xf32, #tpu.memory_space<vmem>>, vector<1x1x128xf32>,
    } else {
    }
    return
  }
  func.func @transform_0(%arg0: i32, %arg1: i32) -> (i32, i32) {
    %c0_i32 = arith.constant 0 : i32
    %c0_i32_0 = arith.constant 0 : i32
    return %arg0, %c0_i32 : i32, i32
  }
  func.func @transform_1(%arg0: i32, %arg1: i32) -> (i32, i32) {
    %c0_i32 = arith.constant 0 : i32
    %c0_i32_0 = arith.constant 0 : i32
    %c0_i32_1 = arith.constant 0 : i32
    return %c0_i32, %c0_i32_0 : i32, i32
  }
  func.func @transform_2(%arg0: i32, %arg1: i32) -> (i32, i32, i32) {
    %c0_i32 = arith.constant 0 : i32
    %c0_i32_0 = arith.constant 0 : i32
    %c0_i32_1 = arith.constant 0 : i32
    return %arg0, %c0_i32, %c0_i32_0 : i32, i32, i32
  }
}

</mosaic_0001>

<llo_original>
// kernel: tpu_custom_call.1
$region0: #{tpu_custom_call.1}
  #allocation0 [shape = 'u32[]', space=smem, size = 0x4, offset = 0x4, fixed_abs, tag = 'smem constant byte address 0x4 - core index']
  #allocation1 [shape = 'u32[144,128]{1,0:T(1,128)}', space=vmem, size = 0x12000, scoped, tag = 'internal scratch']
  #allocation2 [shape = 'f32[8,1]{1,0:T(8,128)}', space=vmem, size = 0x1000, scoped, tag = 'scratch operand']
  #allocation3 [shape = 'f32[8,1]{1,0:T(8,128)}', space=vmem, size = 0x1000, scoped, tag = 'scratch operand']
  %s0 = inlined_call_operand.hbm [shape: f32[8,128], index: 0, kind: input, shape index: {}]
  %s1 = inlined_call_operand.hbm [shape: f32[8,128], index: 1, kind: input, shape index: {}]
  %s2 = inlined_call_operand.hbm [shape: f32[1,1,128], index: 2, kind: output, shape index: {}]
  %s3 = sld [smem:[#allocation0]]
  $region42: #{tpu_custom_call.1} parent=0
    _
  %s5 = ssub.s32 1, %s3
  %s6 = scalar_select 0, %s5, %s3
  $region1: #{tpu_custom_call.1} parent=0
    #allocation4 [shape = 'u8[4096]{0}', space=vmem, size = 0x1000, scoped, tag = 'input window, operand 0, single buffered']
    #allocation5 [shape = 's32[1]{0}', space=sflag, size = 0x4, scoped, tag = 'scoped memory for tpu_custom_call.1']
    #allocation6 [shape = 's32[1]{0}', space=sflag, size = 0x4, scoped, tag = 'scoped memory for tpu_custom_call.1']
    #allocation7 [shape = 'u8[4096]{0}', space=vmem, size = 0x1000, scoped, tag = 'input window, operand 1, single buffered']
    #allocation8 [shape = 's32[1]{0}', space=sflag, size = 0x4, scoped, tag = 'scoped memory for tpu_custom_call.1']
    #allocation9 [shape = 'u8[512]{0}', space=vmem, size = 0x400, scoped, tag = 'output window, operand 0, single buffered']
    %7 = vsyncpa [#allocation5], 0
    %8 = vsyncpa [#allocation8], 0
    %9 = vsyncpa [#allocation6], 0
    // Predicated region
    $region2: #{tpu_custom_call.1} parent=1 // pred_check
      _
    $region3: #{tpu_custom_call.1} parent=1 // pred_check_branch
      %11 = sbr.rel (0) target = $region5
    $region4: #{tpu_custom_call.1} parent=1 // pred_region
      %s13 = ssub.s32 128, 128
      %14 = vsyncadd [#allocation5], %s13
      %s16 = sshll.u32 [#allocation4], 4
      %s17 = int_to_ptr.vmem [resolvable:$true] %s16
      %19 = dma.hbm_to_vmem [thread:$0]  %s0, 128, %s17, [#allocation5]
    $region5: #{tpu_custom_call.1} parent=1 // pred_fallthru
      _
    // Predicated region
    $region6: #{tpu_custom_call.1} parent=1 // pred_check
      _
    $region7: #{tpu_custom_call.1} parent=1 // pred_check_branch
      %21 = sbr.rel (0) target = $region9
    $region8: #{tpu_custom_call.1} parent=1 // pred_region
      %s23 = ssub.s32 128, 128
      %24 = vsyncadd [#allocation8], %s23
      %s26 = sshll.u32 [#allocation7], 4
      %s27 = int_to_ptr.vmem [resolvable:$true] %s26
      %29 = dma.hbm_to_vmem [thread:$0]  %s1, 128, %s27, [#allocation8]
    $region9: #{tpu_custom_call.1} parent=1 // pred_fallthru
      _
    // Predicated region
    $region10: #{tpu_custom_call.1} parent=1 // pred_check
      _
    $region11: #{tpu_custom_call.1} parent=1 // pred_check_branch
      %31 = sbr.rel (0) target = $region13
    $region12: #{tpu_custom_call.1} parent=1 // pred_region
      %32 = dma.done [#allocation5], 128
    $region13: #{tpu_custom_call.1} parent=1 // pred_fallthru
      _
    // Predicated region
    $region14: #{tpu_custom_call.1} parent=1 // pred_check
      _
    $region15: #{tpu_custom_call.1} parent=1 // pred_check_branch
      %34 = sbr.rel (0) target = $region17
    $region16: #{tpu_custom_call.1} parent=1 // pred_region
      %35 = dma.done [#allocation8], 128
    $region17: #{tpu_custom_call.1} parent=1 // pred_fallthru
      _
    %p36 = scmp.eq.s32.totalorder 0, 0
    // Predicated region
    $region18: #{tpu_custom_call.1} parent=1 // pred_check
      %p37 = pneg %p36
    $region19: #{tpu_custom_call.1} parent=1 // pred_check_branch
      %39 = sbr.rel (%p37) target = $region21
    $region20: #{tpu_custom_call.1} parent=1 // pred_region
      %vm40 = vcmask 7168
      %41 = vst.msk [vmem:[#allocation2] sm:$0xff] %vm40, 0.0
      %42 = vst.msk [vmem:[#allocation3] sm:$0xff] %vm40, 1.0
    $region21: #{tpu_custom_call.1} parent=1 // pred_fallthru
      _
    %s43 = smul.u32 0, 8
    %s44 = scalar_lea.vmem [#allocation7], %s43
    %v45 = vld [vmem:[%s44] sm:$0xff]
    %v46 = vld [vmem:[#allocation4] sm:$0xff]
    %47 = vmatprep.subr.mxu0 0.0
    %48 = vmatpush1.xpose.msra.mxu0 %v45
    %49 = vmatprep.subr.mxu0 0.0
    %50 = vmatpush1.xpose.msra.mxu0 0.0
    %51 = vmatprep.subr.mxu0 0.0
    %52 = vmatpush1.xpose.msra.mxu0 0.0
    %53 = vmatprep.subr.mxu0 0.0
    %54 = vmatpush1.xpose.msra.mxu0 0.0
    %55 = vmatprep.subr.mxu0 0.0
    %56 = vmatpush1.xpose.msra.mxu0 0.0
    %57 = vmatprep.subr.mxu0 0.0
    %58 = vmatpush1.xpose.msra.mxu0 0.0
    %59 = vmatprep.subr.mxu0 0.0
    %60 = vmatpush1.xpose.msra.mxu0 0.0
    %61 = vmatprep.subr.mxu0 0.0
    %62 = vmatpush1.xpose.msra.mxu0 0.0
    %63 = vmatprep.subr.mxu0 0.0
    %64 = vmatpush1.xpose.msra.mxu0 0.0
    %65 = vmatprep.subr.mxu0 0.0
    %66 = vmatpush1.xpose.msra.mxu0 0.0
    %67 = vmatprep.subr.mxu0 0.0
    %68 = vmatpush1.xpose.msra.mxu0 0.0
    %69 = vmatprep.subr.mxu0 0.0
    %70 = vmatpush1.xpose.msra.mxu0 0.0
    %71 = vmatprep.subr.mxu0 0.0
    %72 = vmatpush1.xpose.msra.mxu0 0.0
    %73 = vmatprep.subr.mxu0 0.0
    %74 = vmatpush1.xpose.msra.mxu0 0.0
    %75 = vmatprep.subr.mxu0 0.0
    %76 = vmatpush1.xpose.msra.mxu0 0.0
    %77 = vmatprep.subr.mxu0 0.0
    %78 = vmatpush1.xpose.msra.mxu0 0.0
    %79 = vmatprep.subr.mxu0 0.0
    %80 = vmatpush1.xpose.msra.mxu0 0.0
    %81 = vmatprep.subr.mxu0 0.0
    %82 = vmatpush1.xpose.msra.mxu0 0.0
    %83 = vmatprep.subr.mxu0 0.0
    %84 = vmatpush1.xpose.msra.mxu0 0.0
    %85 = vmatprep.subr.mxu0 0.0
    %86 = vmatpush1.xpose.msra.mxu0 0.0
    %87 = vmatprep.subr.mxu0 0.0
    %88 = vmatpush1.xpose.msra.mxu0 0.0
    %89 = vmatprep.subr.mxu0 0.0
    %90 = vmatpush1.xpose.msra.mxu0 0.0
    %91 = vmatprep.subr.mxu0 0.0
    %92 = vmatpush1.xpose.msra.mxu0 0.0
    %93 = vmatprep.subr.mxu0 0.0
    %94 = vmatpush1.xpose.msra.mxu0 0.0
    %95 = vmatprep.subr.mxu0 0.0
    %96 = vmatpush1.xpose.msra.mxu0 0.0
    %97 = vmatprep.subr.mxu0 0.0
    %98 = vmatpush1.xpose.msra.mxu0 0.0
    %99 = vmatprep.subr.mxu0 0.0
    %100 = vmatpush1.xpose.msra.mxu0 0.0
    %101 = vmatprep.subr.mxu0 0.0
    %102 = vmatpush1.xpose.msra.mxu0 0.0
    %103 = vmatprep.subr.mxu0 0.0
    %104 = vmatpush1.xpose.msra.mxu0 0.0
    %105 = vmatprep.subr.mxu0 0.0
    %106 = vmatpush1.xpose.msra.mxu0 0.0
    %107 = vmatprep.subr.mxu0 0.0
    %108 = vmatpush1.xpose.msra.mxu0 0.0
    %109 = vmatprep.subr.mxu0 0.0
    %110 = vmatpush1.xpose.msra.mxu0 0.0
    %111 = vmatprep.mubr.f32.mxu0 0.0
    %112 = vmatmul.mubr.f32.gmra.mrb[0].mxu0 %v46
    %v113 = vpop.f32.mrb[0].mxu0
    %v114 = vadd.f32 0.0, %v113
    %v115 = vpop.f32.mrb[0].mxu0
    %116 = vdwg.mxu0
    %s117 = smul.u32 0, 8
    %s118 = sadd.s32 %s117, 8
    %p119 = scmp.lt.s32.totalorder %s43, %s118
    %s120 = sadd.s32 %s43, 8
    %p121 = scmp.lt.s32.totalorder %s117, %s120
    %p122 = pnand %p119, %p121
    %p123 = pneg %p122
    %s124 = sadd.s32 %s117, 4
    %s125 = sadd.s32 %s117, 12
    %p126 = scmp.lt.s32.totalorder %s43, %s125
    %p127 = scmp.lt.s32.totalorder %s124, %s120
    %p128 = pnand %p126, %p127
    %p129 = pneg %p128
    %p130 = por %p123, %p129
    %s131 = sadd.s32 %s117, 4294967292
    %p132 = scmp.lt.s32.totalorder %s43, %s124
    %p133 = scmp.lt.s32.totalorder %s131, %s120
    %p134 = pnand %p132, %p133
    %p135 = pneg %p134
    %p136 = por %p130, %p135
    // Predicated region
    $region22: #{tpu_custom_call.1} parent=1 // pred_check
      %p137 = pneg %p136
    $region23: #{tpu_custom_call.1} parent=1 // pred_check_branch
      %139 = sbr.rel (%p137) target = $region25
    $region24: #{tpu_custom_call.1} parent=1 // pred_region
      %v140 = vlaneseq
      %v141 = vshrl.u32 %v140, 7
      %v142 = vstv %s117
      %v143 = vadd.s32 %v142, %v141
      %v144 = vlaneseq
      %v145 = vand.u32 %v144, 127
      %v146 = vstv %s43
      %v147 = vadd.s32 %v146, %v145
      %vm148 = vcmp.eq.s32.totalorder %v147, %v143
      %v149 = vadd.s32 %v143, 4
      %vm150 = vcmp.eq.s32.totalorder %v147, %v149
      %vm151 = vmor %vm148, %vm150
      %v152 = vsub.s32 %v143, 4
      %vm153 = vcmp.eq.s32.totalorder %v147, %v152
      %vm154 = vmor %vm151, %vm153
      %v155 = vsel %vm154, -1e+30, %v114
      %v156 = vld [vmem:[#allocation2] sm:$0xff]
      %vm157 = vcmask 64512
      %v158 = vsel %vm157, %v155, -inf
      %159 = vmax.xlane.f32.xlu0 %v158
      %v160 = vpop.xlane.xlu0 %159
      %v161 = vmax.f32 %v156, %v160
      %v162 = vld [vmem:[#allocation3] sm:$0xff]
      %v163 = vsub.f32 %v156, %v161
      %v164 = vmul.f32 %v163, 1.442695
      %v165 = vpow.pop %v164
      %v166 = vmul.f32 %v162, %v165
      %168 = vset.pattern.permute.xlu0 0
      %169 = vperm.xlu0 %168, %v161
      %v170 = vpop.permute.xlu0 %169
      %v172 = vsub.f32 %v155, %v170
      %v173 = vmul.f32 %v172, 1.442695
      %v174 = vpow.pop %v173
      %v175 = vsel %vm157, %v174, 0.0
      %176 = vadd.xlane.f32.xlu0 %v175
      %v177 = vpop.xlane.xlu0 %176
      %v178 = vadd.f32 %v166, %v177
      %vm179 = vcmask 7168
      %180 = vst.msk [vmem:[#allocation3] sm:$0xff] %vm179, %v178
      %181 = vst.msk [vmem:[#allocation2] sm:$0xff] %vm179, %v161
    $region25: #{tpu_custom_call.1} parent=1 // pred_fallthru
      _
    %p182 = pneg %p136
    // Predicated region
    $region26: #{tpu_custom_call.1} parent=1 // pred_check
      _
    $region27: #{tpu_custom_call.1} parent=1 // pred_check_branch
      %184 = sbr.rel (%p136) target = $region29
    $region28: #{tpu_custom_call.1} parent=1 // pred_region
      %v185 = vld [vmem:[#allocation2] sm:$0xff]
      %vm186 = vcmask 64512
      %v187 = vsel %vm186, %v114, -inf
      %188 = vmax.xlane.f32.xlu0 %v187
      %v189 = vpop.xlane.xlu0 %188
      %v190 = vmax.f32 %v185, %v189
      %v191 = vld [vmem:[#allocation3] sm:$0xff]
      %v192 = vsub.f32 %v185, %v190
      %v193 = vmul.f32 %v192, 1.442695
      %v194 = vpow.pop %v193
      %v195 = vmul.f32 %v191, %v194
      %197 = vset.pattern.permute.xlu0 0
      %198 = vperm.xlu0 %197, %v190
      %v199 = vpop.permute.xlu0 %198
      %v201 = vsub.f32 %v114, %v199
      %v202 = vmul.f32 %v201, 1.442695
      %v203 = vpow.pop %v202
      %v204 = vsel %vm186, %v203, 0.0
      %205 = vadd.xlane.f32.xlu0 %v204
      %v206 = vpop.xlane.xlu0 %205
      %v207 = vadd.f32 %v195, %v206
      %vm208 = vcmask 7168
      %209 = vst.msk [vmem:[#allocation3] sm:$0xff] %vm208, %v207
      %210 = vst.msk [vmem:[#allocation2] sm:$0xff] %vm208, %v190
    $region29: #{tpu_custom_call.1} parent=1 // pred_fallthru
      _
    // Predicated region
    $region30: #{tpu_custom_call.1} parent=1 // pred_check
      %p211 = pneg %p36
    $region31: #{tpu_custom_call.1} parent=1 // pred_check_branch
      %213 = sbr.rel (%p211) target = $region33
    $region32: #{tpu_custom_call.1} parent=1 // pred_region
      %v214 = vld [vmem:[#allocation2] sm:$0xff]
      %v215 = vld [vmem:[#allocation3] sm:$0xff]
      %v216 = vlog2.pop %v215
      %v217 = vmul.f32 %v216, 0.6931472
      %v218 = vadd.f32 %v214, %v217
      %v219 = vlaneseq
      %v220 = vand.u32 %v219, 127
      %vm221 = vcmp.eq.s32.totalorder %v220, 0
      %vm222 = vcmask 7168
      %v223 = vsel %vm222, %v218, 0.0
      %224 = vadd.xlane.f32.xlu0 %v223
      %v225 = vpop.xlane.xlu0 %224
      %v226 = vrot.slane %v225, 4
      %v227 = vadd.f32 %v225, %v226
      %v228 = vrot.slane %v227, 2
      %v229 = vadd.f32 %v227, %v228
      %v230 = vrot.slane %v229, 1
      %v231 = vadd.f32 %v229, %v230
      %s232 = vtos %v231
      %v233 = vstv %s232
      %v234 = vsel %vm221, %v233, 0.0
      %235 = vst [vmem:[#allocation9] sm:$0x1] %v234
    $region33: #{tpu_custom_call.1} parent=1 // pred_fallthru
      _
    // Predicated region
    $region34: #{tpu_custom_call.1} parent=1 // pred_check
      _
    $region35: #{tpu_custom_call.1} parent=1 // pred_check_branch
      %237 = sbr.rel (0) target = $region37
    $region36: #{tpu_custom_call.1} parent=1 // pred_region
      %s239 = ssub.s32 16, 16
      %240 = vsyncadd [#allocation6], %s239
      %s242 = sshll.u32 [#allocation9], 4
      %s243 = int_to_ptr.vmem [resolvable:$true] %s242
      %245 = dma.vmem_to_hbm [thread:$0]  %s243, 16, %s2, [#allocation6]
    $region37: #{tpu_custom_call.1} parent=1 // pred_fallthru
      _
    // Predicated region
    $region38: #{tpu_custom_call.1} parent=1 // pred_check
      _
    $region39: #{tpu_custom_call.1} parent=1 // pred_check_branch
      %247 = sbr.rel (0) target = $region41
    $region40: #{tpu_custom_call.1} parent=1 // pred_region
      %248 = dma.done [#allocation6], 16
    $region41: #{tpu_custom_call.1} parent=1 // pred_fallthru
      _
    %249 = vsyncpa [#allocation5], 1
    %250 = vsyncpa [#allocation8], 1
    %251 = vsyncpa [#allocation6], 1

</llo_original>
